<compile_context>
chip_gen: v6e
topology: v6e:2x2x1
jax: 0.10.0
libtpu: 0.0.40
codegen_flags: <defaults>
</compile_context>

<pallas_src>
import functools

import jax
import jax.numpy as jnp
import numpy as np
from jax import lax
from jax.experimental import pallas as pl
from jax.experimental.pallas import tpu as pltpu


# ----------------------------------------------------------------------------
# In-kernel helpers
# ----------------------------------------------------------------------------
def _gemm(w_ref, x_ref, k):
    """(Cout, k) @ (k, L) -> (Cout, L) f32.

    Tiny contractions (1x1 convs, k <= 8) are done as k broadcast FMAs on the
    VPU (skips MXU result-FIFO latency on a ~0%-utilized matmul); larger
    contractions go through the MXU with f32 accumulation.
    """
    if k <= 8:
        x = x_ref[...].astype(jnp.float32)
        w = w_ref[...].astype(jnp.float32)
        acc = w[:, 0:1] * x[0:1, :]
        for i in range(1, k):                       # k is tiny & static
            acc = acc + w[:, i:i + 1] * x[i:i + 1, :]
        return acc
    return jnp.dot(w_ref[...], x_ref[...], preferred_element_type=jnp.float32)


def _bn_apply(acc, gamma, beta, eps, n_valid):
    """Training-mode BatchNorm over the lane dim of acc (Cout, L), in f32."""
    n_total = acc.shape[-1]
    if n_valid != n_total:                          # static branch (lane padding)
        lane = lax.broadcasted_iota(jnp.int32, acc.shape, 1)
        valid = lane < n_valid
        s = jnp.sum(jnp.where(valid, acc, 0.0), axis=1, keepdims=True)
        sq = jnp.sum(jnp.where(valid, acc * acc, 0.0), axis=1, keepdims=True)
    else:
        s = jnp.sum(acc, axis=1, keepdims=True)
        sq = jnp.sum(acc * acc, axis=1, keepdims=True)
    cnt = jnp.float32(n_valid)
    mean = s / cnt
    var = jnp.maximum(sq / cnt - mean * mean, 0.0)  # biased var, clamp cancellation
    scale = gamma * lax.rsqrt(var + eps)
    return acc * scale + (beta - mean * scale)


# ----------------------------------------------------------------------------
# Fused conv(GEMM) + BN(batch stats) [+ fused residual branch] [+ ReLU] kernel
# ----------------------------------------------------------------------------
def _fused_conv_bn_kernel(*refs, k_dim, eps, relu, has_bias, res_mode, res_k,
                          n_valid):
    """Single grid step; batch is folded into the lane dim.

    refs (in order):
      x_ref   (k_dim, L)    conv operand (im2col patches or raw channels)
      w_ref   (Cout, k_dim) folded conv weight
      gb_ref  (Cout, 2|3)   packed [gamma, beta(, conv bias)]
      [xres_ref (Cres, L)]  residual input                 (res_mode != "none")
      [wr_ref (Cout, Cres)] residual 1x1 conv weight       (res_mode == "proj")
      [gbr_ref (Cout, 2)]   residual BN [gamma, beta]      (res_mode == "proj")
      o_ref   (Cout, L)
    """
    it = iter(refs)
    x_ref = next(it)
    w_ref = next(it)
    gb_ref = next(it)
    if res_mode == "proj":
        xres_ref, wr_ref, gbr_ref = next(it), next(it), next(it)
    elif res_mode == "identity":
        xres_ref = next(it)
    o_ref = next(it)

    acc = _gemm(w_ref, x_ref, k_dim)                         # (Cout, L) f32
    if has_bias:
        acc = acc + gb_ref[:, 2:3]                           # (Cout,1) lane bcast
    y = _bn_apply(acc, gb_ref[:, 0:1], gb_ref[:, 1:2], eps, n_valid)

    if res_mode == "proj":
        acc_r = _gemm(wr_ref, xres_ref, res_k)               # VPU FMA path
        y = y + _bn_apply(acc_r, gbr_ref[:, 0:1], gbr_ref[:, 1:2], eps, n_valid)
    elif res_mode == "identity":
        y = y + xres_ref[...].astype(jnp.float32)

    if relu:
        y = jnp.maximum(y, 0.0)
    o_ref[...] = y.astype(o_ref.dtype)                       # lane-dense store


def _fused_conv_bn(x_mat, w, gamma, beta, *, bias=None, relu, eps, n_valid,
                   out_dtype, residual=None, res_w=None, res_gamma=None,
                   res_beta=None):
    """x_mat (K, L), w (Cout, K) -> (Cout, L) `out_dtype` in one pallas_call."""
    k_dim, l = x_mat.shape
    c_out = w.shape[0]

    cols = [gamma.reshape(c_out, 1), beta.reshape(c_out, 1)]
    if bias is not None:
        cols.append(bias.reshape(c_out, 1))
    gb = jnp.concatenate(cols, axis=1).astype(jnp.float32)   # (Cout, 2|3)

    args = [x_mat, w, gb]
    in_specs = [
        pl.BlockSpec(x_mat.shape, lambda i: (0, 0)),
        pl.BlockSpec(w.shape, lambda i: (0, 0)),
        pl.BlockSpec(gb.shape, lambda i: (0, 0)),
    ]

    if residual is not None and res_w is not None:
        res_mode, res_k = "proj", residual.shape[0]
        gbr = jnp.concatenate([res_gamma.reshape(c_out, 1),
                               res_beta.reshape(c_out, 1)],
                              axis=1).astype(jnp.float32)
        args += [residual, res_w.astype(jnp.float32), gbr]
        in_specs += [pl.BlockSpec(residual.shape, lambda i: (0, 0)),
                     pl.BlockSpec((c_out, res_k), lambda i: (0, 0)),
                     pl.BlockSpec(gbr.shape, lambda i: (0, 0))]
    elif residual is not None:
        res_mode, res_k = "identity", residual.shape[0]
        args += [residual]
        in_specs += [pl.BlockSpec(residual.shape, lambda i: (0, 0))]
    else:
        res_mode, res_k = "none", 0

    kernel = functools.partial(
        _fused_conv_bn_kernel, k_dim=k_dim, eps=eps, relu=relu,
        has_bias=bias is not None, res_mode=res_mode, res_k=res_k,
        n_valid=n_valid)

    return pl.pallas_call(
        kernel,
        out_shape=jax.ShapeDtypeStruct((c_out, l), out_dtype),
        grid_spec=pltpu.PrefetchScalarGridSpec(
            num_scalar_prefetch=0,
            grid=(1,),
            in_specs=in_specs,
            out_specs=pl.BlockSpec((c_out, l), lambda i: (0, 0)),
        ),
        # Tiny VMEM footprint at these shapes; default scoped limit suffices on
        # every generation (see TODO in header for production-shape tiling).
        compiler_params=pltpu.CompilerParams(
            dimension_semantics=("arbitrary",)),
    )(*args)


# ----------------------------------------------------------------------------
# Wrapper-side data movement (pure indexing / layout, no FLOPs)
# ----------------------------------------------------------------------------
def _nearest_upsample_last3(x, target):
    """PyTorch nn.Upsample(size=target, mode='nearest') on the last 3 dims."""
    d, h, w = x.shape[-3:]
    x = jnp.take(x, (jnp.arange(target) * d) // target, axis=-3)
    x = jnp.take(x, (jnp.arange(target) * h) // target, axis=-2)
    x = jnp.take(x, (jnp.arange(target) * w) // target, axis=-1)
    return x


def _im2col_3x3x3_cmajor(x):
    """im2col for a 3x3x3 / stride-1 / pad-1 conv on a channel-major tensor.

    (C, N, D, H, W) -> (C*27, N*D*H*W); row index c*27 + tap matches the
    row-major reshape of a torch (Cout, C, 3, 3, 3) weight to (Cout, C*27),
    and columns are already in (n, d, h, w) lane order (no transposes).
    """
    c, n, d, h, w = x.shape
    xp = jnp.pad(x, ((0, 0), (0, 0), (1, 1), (1, 1), (1, 1)))
    taps = [xp[:, :, kd:kd + d, kh:kh + h, kw:kw + w]
            for kd in range(3) for kh in range(3) for kw in range(3)]
    patches = jnp.stack(taps, axis=1)                  # (C, 27, N, D, H, W)
    return patches.reshape(c * 27, n * d * h * w)


def _pad_lanes(a, l_pad):
    l = a.shape[-1]
    return a if l == l_pad else jnp.pad(a, ((0, 0), (0, l_pad - l)))


# ----------------------------------------------------------------------------
# Decoder_ResBlock forward
# ----------------------------------------------------------------------------
def decoder_resblock_forward(x, skip, params, *, eps=1e-5):
    """x: (N, Cin, d, h, w), skip: (N, Cskip, T, T, T) -> (N, Cout, T, T, T)."""
    n, c_in = x.shape[:2]
    c_skip, t = skip.shape[1], skip.shape[-1]
    rows = t * t * t
    l_valid = n * rows
    l_pad = ((l_valid + 127) // 128) * 128             # lane-dense stores
    c_out = params["conv1_w"].shape[0]

    # Channel-major layout so im2col / GEMM lanes need no per-stage transposes.
    x_cn = jnp.transpose(x, (1, 0, 2, 3, 4)).astype(jnp.float32)
    skip_cn = jnp.transpose(skip, (1, 0, 2, 3, 4)).astype(jnp.bfloat16)

    # ---- Upsample(x, T, skip_channels): nearest + 1x1 conv(+bias) + BN + ReLU
    x_up = _pad_lanes(
        _nearest_upsample_last3(x_cn, t).reshape(c_in, l_valid), l_pad)
    x_proj = _fused_conv_bn(                                   # (Cskip, L) bf16
        x_up, params["up_conv_w"].reshape(c_skip, c_in),
        params["up_bn_g"], params["up_bn_b"], bias=params["up_conv_b"],
        relu=True, eps=eps, n_valid=l_valid, out_dtype=jnp.bfloat16)

    # ---- conv1 (3x3x3 on concat) + bn1 + dropout(identity) + relu -----------
    cat = jnp.concatenate(
        [x_proj[:, :l_valid].reshape(c_skip, n, t, t, t), skip_cn], axis=0)
    p1 = _pad_lanes(_im2col_3x3x3_cmajor(cat), l_pad)          # bf16 patches
    h1 = _fused_conv_bn(                                       # (Cout, L) bf16
        p1, params["conv1_w"].reshape(c_out, -1).astype(jnp.bfloat16),
        params["bn1_g"], params["bn1_b"], relu=True, eps=eps,
        n_valid=l_valid, out_dtype=jnp.bfloat16)
    # TODO(synk): Dropout(p=0.2, inplace=True) treated as identity (see header).

    # ---- conv2 + bn2 + residual branch (1x1 conv + BN or identity) + relu ---
    p2 = _pad_lanes(
        _im2col_3x3x3_cmajor(h1[:, :l_valid].reshape(c_out, n, t, t, t)), l_pad)
    if "res_conv_w" in params:
        res_kwargs = dict(residual=x_proj,
                          res_w=params["res_conv_w"].reshape(c_out, -1),
                          res_gamma=params["res_bn_g"],
                          res_beta=params["res_bn_b"])
    else:
        assert c_skip == c_out, (
            "identity residual requires skip_channels == out_channels")
        res_kwargs = dict(residual=x_proj)
    out = _fused_conv_bn(                                      # (Cout, L) f32
        p2, params["conv2_w"].reshape(c_out, -1).astype(jnp.bfloat16),
        params["bn2_g"], params["bn2_b"], relu=True, eps=eps,
        n_valid=l_valid, out_dtype=jnp.float32, **res_kwargs)

    out = out[:, :l_valid].reshape(c_out, n, t, t, t)
    return jnp.transpose(out, (1, 0, 2, 3, 4))                 # NCDHW


# ----------------------------------------------------------------------------
# Pure-JAX f32 reference mirroring the PyTorch module (training-mode BN)
# ----------------------------------------------------------------------------
def _conv3d_ref(x, w, b=None, padding=0):
    y = lax.conv_general_dilated(
        x, w, window_strides=(1, 1, 1), padding=[(padding, padding)] * 3,
        dimension_numbers=("NCDHW", "OIDHW", "NCDHW"),
        precision=lax.Precision.HIGHEST)
    if b is not None:
        y = y + b.reshape(1, -1, 1, 1, 1)
    return y


def _bn_ref(y, gamma, beta, eps, relu):
    mean = y.mean(axis=(0, 2, 3, 4), keepdims=True)
    var = y.var(axis=(0, 2, 3, 4), keepdims=True)        # biased (BN training)
    y = (y - mean) / jnp.sqrt(var + eps)
    y = y * gamma.reshape(1, -1, 1, 1, 1) + beta.reshape(1, -1, 1, 1, 1)
    return jnp.maximum(y, 0.0) if relu else y


def reference_forward(x, skip, params, eps=1e-5):
    t = skip.shape[-1]
    x_up = _nearest_upsample_last3(x, t)
    x_proj = _bn_ref(_conv3d_ref(x_up, params["up_conv_w"], params["up_conv_b"]),
                     params["up_bn_g"], params["up_bn_b"], eps, relu=True)
    residual = x_proj
    cat = jnp.concatenate([x_proj, skip], axis=1)
    out = _conv3d_ref(cat, params["conv1_w"], padding=1)
    out = _bn_ref(out, params["bn1_g"], params["bn1_b"], eps, relu=True)  # dropout = id
    out = _conv3d_ref(out, params["conv2_w"], padding=1)
    out = _bn_ref(out, params["bn2_g"], params["bn2_b"], eps, relu=False)
    if "res_conv_w" in params:
        residual = _bn_ref(_conv3d_ref(residual, params["res_conv_w"]),
                           params["res_bn_g"], params["res_bn_b"], eps, relu=False)
    return jnp.maximum(out + residual, 0.0)


# ----------------------------------------------------------------------------
if __name__ == "__main__":
    root = jax.random.PRNGKey(0)
    ks = jax.random.split(root, 14)

    # in_channels = skip_channels = 4 (required by the module's own forward),
    # out_channels = 8 (!= in_channels -> upsample_residual branch is active).
    n, c_in, c_skip, c_out = 2, 4, 4, 8
    d_small, t = 4, 8                      # x is 4^3, skip (target size) is 8^3

    x = jax.random.normal(ks[0], (n, c_in, d_small, d_small, d_small), jnp.float32)
    skip = jax.random.normal(ks[1], (n, c_skip, t, t, t), jnp.float32)

    def g(k, shape, s=1.0):
        return s * jax.random.normal(k, shape, jnp.float32)

    params = {
        # Upsample(): nn.Conv3d(c_in, c_skip, 1, bias=True) + BN + ReLU
        "up_conv_w": g(ks[2], (c_skip, c_in, 1, 1, 1), 0.3),
        "up_conv_b": g(ks[3], (c_skip,), 0.1),
        "up_bn_g": jax.random.uniform(ks[4], (c_skip,), jnp.float32, 0.5, 1.5),
        "up_bn_b": g(ks[5], (c_skip,), 0.1),
        # conv1: 3x3x3, in = in_channels + skip_channels, bias=False
        "conv1_w": g(ks[6], (c_out, c_in + c_skip, 3, 3, 3), 0.1),
        "bn1_g": jax.random.uniform(ks[7], (c_out,), jnp.float32, 0.5, 1.5),
        "bn1_b": g(ks[8], (c_out,), 0.1),
        # conv2: 3x3x3, bias=False
        "conv2_w": g(ks[9], (c_out, c_out, 3, 3, 3), 0.1),
        "bn2_g": jax.random.uniform(ks[10], (c_out,), jnp.float32, 0.5, 1.5),
        "bn2_b": g(ks[11], (c_out,), 0.1),
        # upsample_residual: 1x1 conv (bias=False) + BN  (in_ch != out_ch)
        "res_conv_w": g(ks[12], (c_out, c_in, 1, 1, 1), 0.3),
        "res_bn_g": jax.random.uniform(ks[13], (c_out,), jnp.float32, 0.5, 1.5),
        "res_bn_b": jnp.zeros((c_out,), jnp.float32),
    }

    out = decoder_resblock_forward(x, skip, params)
    out = jax.block_until_ready(out)

    ref = reference_forward(x, skip, params)
    # 3x3x3 GEMMs use bf16 MXU operands (f32 accumulation) and the bf16
    # inter-stage intermediates add ~2e-3 relative noise per stage; across the
    # stacked conv+BN stages this gives ~1e-2-level agreement with the pure-f32
    # reference, so the tolerance is set accordingly.
    np.testing.assert_allclose(np.asarray(out), np.asarray(ref),
                               rtol=5e-2, atol=5e-2)

    print("KERNEL_OK")
</pallas_src>

<mosaic_0001>
module attributes {stable_mosaic.version = 11 : i64} {
  func.func @_fused_conv_bn_kernel(%arg0: i32, %arg1: memref<4x1024xf32, #tpu.memory_space<vmem>>, %arg2: memref<4x4xf32, #tpu.memory_space<vmem>>, %arg3: memref<4x3xf32, #tpu.memory_space<vmem>>, %arg4: memref<4x1024xbf16, #tpu.memory_space<vmem>>) attributes {dimension_semantics = [#tpu.dimension_semantics<arbitrary>], iteration_bounds = array<i64: 1>, scalar_prefetch = 0 : i64, scratch_operands = 0 : i64, tpu.core_type = #tpu.core_type<tc>, window_params = [{pipeline_mode = #tpu.pipeline_mode<synchronous>, transform_indices = @transform_0, window_bounds = array<i64: 4, 1024>}, {pipeline_mode = #tpu.pipeline_mode<synchronous>, transform_indices = @transform_1, window_bounds = array<i64: 4, 4>}, {pipeline_mode = #tpu.pipeline_mode<synchronous>, transform_indices = @transform_2, window_bounds = array<i64: 4, 3>}, {pipeline_mode = #tpu.pipeline_mode<synchronous>, transform_indices = @transform_3, window_bounds = array<i64: 4, 1024>}]} {
    %c0 = arith.constant 0 : index
    %c0_0 = arith.constant 0 : index
    %0 = vector.load %arg1[%c0, %c0_0] : memref<4x1024xf32, #tpu.memory_space<vmem>>, vector<4x1024xf32>
    %c0_1 = arith.constant 0 : index
    %c0_2 = arith.constant 0 : index
    %1 = vector.load %arg2[%c0_1, %c0_2] : memref<4x4xf32, #tpu.memory_space<vmem>>, vector<4x4xf32>
    %2 = vector.extract_strided_slice %1 {offsets = [0, 0], sizes = [4, 1], strides = [1, 1]} : vector<4x4xf32> to vector<4x1xf32>
    %3 = vector.extract_strided_slice %0 {offsets = [0, 0], sizes = [1, 1024], strides = [1, 1]} : vector<4x1024xf32> to vector<1x1024xf32>
    %4 = vector.broadcast %2 : vector<4x1xf32> to vector<4x1024xf32>
    %5 = vector.broadcast %3 : vector<1x1024xf32> to vector<4x1024xf32>
    %6 = arith.mulf %4, %5 : vector<4x1024xf32>
    %7 = vector.extract_strided_slice %1 {offsets = [0, 1], sizes = [4, 1], strides = [1, 1]} : vector<4x4xf32> to vector<4x1xf32>
    %8 = vector.extract_strided_slice %0 {offsets = [1, 0], sizes = [1, 1024], strides = [1, 1]} : vector<4x1024xf32> to vector<1x1024xf32>
    %9 = vector.broadcast %7 : vector<4x1xf32> to vector<4x1024xf32>
    %10 = vector.broadcast %8 : vector<1x1024xf32> to vector<4x1024xf32>
    %11 = arith.mulf %9, %10 : vector<4x1024xf32>
    %12 = arith.addf %6, %11 : vector<4x1024xf32>
    %13 = vector.extract_strided_slice %1 {offsets = [0, 2], sizes = [4, 1], strides = [1, 1]} : vector<4x4xf32> to vector<4x1xf32>
    %14 = vector.extract_strided_slice %0 {offsets = [2, 0], sizes = [1, 1024], strides = [1, 1]} : vector<4x1024xf32> to vector<1x1024xf32>
    %15 = vector.broadcast %13 : vector<4x1xf32> to vector<4x1024xf32>
    %16 = vector.broadcast %14 : vector<1x1024xf32> to vector<4x1024xf32>
    %17 = arith.mulf %15, %16 : vector<4x1024xf32>
    %18 = arith.addf %12, %17 : vector<4x1024xf32>
    %19 = vector.extract_strided_slice %1 {offsets = [0, 3], sizes = [4, 1], strides = [1, 1]} : vector<4x4xf32> to vector<4x1xf32>
    %20 = vector.extract_strided_slice %0 {offsets = [3, 0], sizes = [1, 1024], strides = [1, 1]} : vector<4x1024xf32> to vector<1x1024xf32>
    %21 = vector.broadcast %19 : vector<4x1xf32> to vector<4x1024xf32>
    %22 = vector.broadcast %20 : vector<1x1024xf32> to vector<4x1024xf32>
    %23 = arith.mulf %21, %22 : vector<4x1024xf32>
    %24 = arith.addf %18, %23 : vector<4x1024xf32>
    %c0_3 = arith.constant 0 : index
    %c2 = arith.constant 2 : index
    %25 = vector.load %arg3[%c0_3, %c2] : memref<4x3xf32, #tpu.memory_space<vmem>>, vector<4x1xf32>
    %26 = vector.broadcast %25 : vector<4x1xf32> to vector<4x1024xf32>
    %27 = arith.addf %24, %26 : vector<4x1024xf32>
    %c0_4 = arith.constant 0 : index
    %c0_5 = arith.constant 0 : index
    %28 = vector.load %arg3[%c0_4, %c0_5] : memref<4x3xf32, #tpu.memory_space<vmem>>, vector<4x1xf32>
    %c0_6 = arith.constant 0 : index
    %c1 = arith.constant 1 : index
    %29 = vector.load %arg3[%c0_6, %c1] : memref<4x3xf32, #tpu.memory_space<vmem>>, vector<4x1xf32>
    %cst = arith.constant dense<0.000000e+00> : vector<4xf32>
    %30 = vector.multi_reduction <add>, %27, %cst [1] : vector<4x1024xf32> to vector<4xf32>
    %31 = vector.shape_cast %30 : vector<4xf32> to vector<4x1xf32>
    %32 = arith.mulf %27, %27 : vector<4x1024xf32>
    %cst_7 = arith.constant dense<0.000000e+00> : vector<4xf32>
    %33 = vector.multi_reduction <add>, %32, %cst_7 [1] : vector<4x1024xf32> to vector<4xf32>
    %34 = vector.shape_cast %33 : vector<4xf32> to vector<4x1xf32>
    %cst_8 = arith.constant 1.024000e+03 : f32
    %35 = vector.broadcast %cst_8 : f32 to vector<4x1xf32>
    %36 = arith.divf %31, %35 : vector<4x1xf32>
    %cst_9 = arith.constant 1.024000e+03 : f32
    %37 = vector.broadcast %cst_9 : f32 to vector<4x1xf32>
    %38 = arith.divf %34, %37 : vector<4x1xf32>
    %39 = arith.mulf %36, %36 : vector<4x1xf32>
    %40 = arith.subf %38, %39 : vector<4x1xf32>
    %cst_10 = arith.constant 0.000000e+00 : f32
    %41 = vector.broadcast %cst_10 : f32 to vector<4x1xf32>
    %42 = arith.maximumf %40, %41 : vector<4x1xf32>
    %cst_11 = arith.constant 9.99999974E-6 : f32
    %43 = vector.broadcast %cst_11 : f32 to vector<4x1xf32>
    %44 = arith.addf %42, %43 : vector<4x1xf32>
    %45 = math.rsqrt %44 : vector<4x1xf32>
    %46 = arith.mulf %28, %45 : vector<4x1xf32>
    %47 = vector.broadcast %46 : vector<4x1xf32> to vector<4x1024xf32>
    %48 = arith.mulf %27, %47 : vector<4x1024xf32>
    %49 = arith.mulf %36, %46 : vector<4x1xf32>
    %50 = arith.subf %29, %49 : vector<4x1xf32>
    %51 = vector.broadcast %50 : vector<4x1xf32> to vector<4x1024xf32>
    %52 = arith.addf %48, %51 : vector<4x1024xf32>
    %cst_12 = arith.constant 0.000000e+00 : f32
    %53 = vector.broadcast %cst_12 : f32 to vector<4x1024xf32>
    %54 = arith.maximumf %52, %53 : vector<4x1024xf32>
    %55 = arith.truncf %54 : vector<4x1024xf32> to vector<4x1024xbf16>
    %c0_13 = arith.constant 0 : index
    %c0_14 = arith.constant 0 : index
    %56 = vector.load %arg4[%c0_13, %c0_14] : memref<4x1024xbf16, #tpu.memory_space<vmem>>, vector<4x1024xbf16>
    tpu.vector_store %arg4[%c0_13, %c0_14], %55 {strides = array<i32>} : memref<4x1024xbf16, #tpu.memory_space<vmem>>, vector<4x1024xbf16>,
    return
  }
  func.func @transform_0(%arg0: i32) -> (i32, i32) {
    %c0_i32 = arith.constant 0 : i32
    %c0_i32_0 = arith.constant 0 : i32
    %c0_i32_1 = arith.constant 0 : i32
    return %c0_i32, %c0_i32_0 : i32, i32
  }
  func.func @transform_1(%arg0: i32) -> (i32, i32) {
    %c0_i32 = arith.constant 0 : i32
    %c0_i32_0 = arith.constant 0 : i32
    %c0_i32_1 = arith.constant 0 : i32
    return %c0_i32, %c0_i32_0 : i32, i32
  }
  func.func @transform_2(%arg0: i32) -> (i32, i32) {
    %c0_i32 = arith.constant 0 : i32
    %c0_i32_0 = arith.constant 0 : i32
    %c0_i32_1 = arith.constant 0 : i32
    return %c0_i32, %c0_i32_0 : i32, i32
  }
  func.func @transform_3(%arg0: i32) -> (i32, i32) {
    %c0_i32 = arith.constant 0 : i32
    %c0_i32_0 = arith.constant 0 : i32
    %c0_i32_1 = arith.constant 0 : i32
    return %c0_i32, %c0_i32_0 : i32, i32
  }
}

</mosaic_0001>

<llo_original>
// kernel: tpu_custom_call.1
$region0: #{tpu_custom_call.1}
  #allocation0 [shape = 'u32[]', space=smem, size = 0x4, offset = 0x4, fixed_abs, tag = 'smem constant byte address 0x4 - core index']
  #allocation1 [shape = 'u32[144,128]{1,0:T(1,128)}', space=vmem, size = 0x12000, scoped, tag = 'internal scratch']
  %s0 = inlined_call_operand.hbm [shape: f32[4,1024], index: 0, kind: input, shape index: {}]
  %s1 = inlined_call_operand.hbm [shape: f32[4,4], index: 1, kind: input, shape index: {}]
  %s2 = inlined_call_operand.hbm [shape: f32[4,3], index: 2, kind: input, shape index: {}]
  %s3 = inlined_call_operand.hbm [shape: bf16[4,1024], index: 3, kind: output, shape index: {}]
  %s4 = sld [smem:[#allocation0]]
  $region34: #{tpu_custom_call.1} parent=0
    _
  %s6 = ssub.s32 1, %s4
  %s7 = scalar_select 0, %s6, %s4
  $region1: #{tpu_custom_call.1} parent=0
    #allocation2 [shape = 'u8[16384]{0}', space=vmem, size = 0x4000, scoped, tag = 'input window, operand 0, single buffered']
    #allocation3 [shape = 's32[1]{0}', space=sflag, size = 0x4, scoped, tag = 'scoped memory for tpu_custom_call.1']
    #allocation4 [shape = 's32[1]{0}', space=sflag, size = 0x4, scoped, tag = 'scoped memory for tpu_custom_call.1']
    #allocation5 [shape = 'u8[2048]{0}', space=vmem, size = 0x800, scoped, tag = 'input window, operand 1, single buffered']
    #allocation6 [shape = 's32[1]{0}', space=sflag, size = 0x4, scoped, tag = 'scoped memory for tpu_custom_call.1']
    #allocation7 [shape = 'u8[2048]{0}', space=vmem, size = 0x800, scoped, tag = 'input window, operand 2, single buffered']
    #allocation8 [shape = 'u8[8192]{0}', space=vmem, size = 0x2000, scoped, tag = 'output window, operand 0, single buffered']
    %8 = vsyncpa [#allocation3], 0
    %9 = vsyncpa [#allocation6], 0
    %10 = vsyncpa [#allocation4], 0
    // Predicated region
    $region2: #{tpu_custom_call.1} parent=1 // pred_check
      _
    $region3: #{tpu_custom_call.1} parent=1 // pred_check_branch
      %12 = sbr.rel (0) target = $region5
    $region4: #{tpu_custom_call.1} parent=1 // pred_region
      %s14 = ssub.s32 512, 512
      %15 = vsyncadd [#allocation3], %s14
      %s17 = sshll.u32 [#allocation2], 4
      %s18 = int_to_ptr.vmem [resolvable:$true] %s17
      %20 = dma.hbm_to_vmem [thread:$0]  %s0, 512, %s18, [#allocation3]
    $region5: #{tpu_custom_call.1} parent=1 // pred_fallthru
      _
    // Predicated region
    $region6: #{tpu_custom_call.1} parent=1 // pred_check
      _
    $region7: #{tpu_custom_call.1} parent=1 // pred_check_branch
      %22 = sbr.rel (0) target = $region9
    $region8: #{tpu_custom_call.1} parent=1 // pred_region
      %s24 = ssub.s32 64, 64
      %25 = vsyncadd [#allocation6], %s24
      %s27 = sshll.u32 [#allocation5], 4
      %s28 = int_to_ptr.vmem [resolvable:$true] %s27
      %30 = dma.hbm_to_vmem [thread:$0]  %s1, 64, %s28, [#allocation6]
    $region9: #{tpu_custom_call.1} parent=1 // pred_fallthru
      _
    // Predicated region
    $region10: #{tpu_custom_call.1} parent=1 // pred_check
      _
    $region11: #{tpu_custom_call.1} parent=1 // pred_check_branch
      %32 = sbr.rel (0) target = $region13
    $region12: #{tpu_custom_call.1} parent=1 // pred_region
      %s34 = ssub.s32 64, 64
      %35 = vsyncadd [#allocation6], %s34
      %s37 = sshll.u32 [#allocation7], 4
      %s38 = int_to_ptr.vmem [resolvable:$true] %s37
      %40 = dma.hbm_to_vmem [thread:$0]  %s2, 64, %s38, [#allocation6]
    $region13: #{tpu_custom_call.1} parent=1 // pred_fallthru
      _
    // Predicated region
    $region14: #{tpu_custom_call.1} parent=1 // pred_check
      _
    $region15: #{tpu_custom_call.1} parent=1 // pred_check_branch
      %42 = sbr.rel (0) target = $region17
    $region16: #{tpu_custom_call.1} parent=1 // pred_region
      %43 = dma.done [#allocation3], 512
    $region17: #{tpu_custom_call.1} parent=1 // pred_fallthru
      _
    // Predicated region
    $region18: #{tpu_custom_call.1} parent=1 // pred_check
      _
    $region19: #{tpu_custom_call.1} parent=1 // pred_check_branch
      %45 = sbr.rel (0) target = $region21
    $region20: #{tpu_custom_call.1} parent=1 // pred_region
      %46 = dma.done [#allocation6], 64
    $region21: #{tpu_custom_call.1} parent=1 // pred_fallthru
      _
    // Predicated region
    $region22: #{tpu_custom_call.1} parent=1 // pred_check
      _
    $region23: #{tpu_custom_call.1} parent=1 // pred_check_branch
      %48 = sbr.rel (0) target = $region25
    $region24: #{tpu_custom_call.1} parent=1 // pred_region
      %49 = dma.done [#allocation6], 64
    $region25: #{tpu_custom_call.1} parent=1 // pred_fallthru
      _
    %v50 = vld [vmem:[#allocation2] sm:$0xff]
    %v51 = vld [vmem:[#allocation2 + $0x8] sm:$0xff]
    %v52 = vld [vmem:[#allocation2 + $0x10] sm:$0xff]
    %v53 = vld [vmem:[#allocation2 + $0x18] sm:$0xff]
    %v54 = vld [vmem:[#allocation5] sm:$0xf]
    %56 = vset.pattern.permute.xlu0 0
    %57 = vperm.xlu0 %56, %v54
    %v58 = vpop.permute.xlu0 %57
    %v64 = vlaneseq
    %v65 = vshrl.u32 %v64, 7
    %v66 = vsub.s32 0, %v65
    %v67 = vrot.slane %v50, %v66
    %v68 = vlaneseq
    %v69 = vshrl.u32 %v68, 7
    %v70 = vsub.s32 4, %v69
    %v71 = vrot.slane %v50, %v70
    %v72 = vlaneseq
    %v73 = vshrl.u32 %v72, 7
    %v74 = vsub.s32 0, %v73
    %v75 = vrot.slane %v51, %v74
    %v76 = vlaneseq
    %v77 = vshrl.u32 %v76, 7
    %v78 = vsub.s32 4, %v77
    %v79 = vrot.slane %v51, %v78
    %v80 = vlaneseq
    %v81 = vshrl.u32 %v80, 7
    %v82 = vsub.s32 0, %v81
    %v83 = vrot.slane %v52, %v82
    %v84 = vlaneseq
    %v85 = vshrl.u32 %v84, 7
    %v86 = vsub.s32 4, %v85
    %v87 = vrot.slane %v52, %v86
    %v88 = vlaneseq
    %v89 = vshrl.u32 %v88, 7
    %v90 = vsub.s32 0, %v89
    %v91 = vrot.slane %v53, %v90
    %v92 = vlaneseq
    %v93 = vshrl.u32 %v92, 7
    %v94 = vsub.s32 4, %v93
    %v95 = vrot.slane %v53, %v94
    %v104 = vlaneseq
    %v105 = vshrl.u32 %v104, 7
    %v106 = vsub.s32 0, %v105
    %v107 = vrot.slane %v67, %v106
    %v108 = vlaneseq
    %v109 = vshrl.u32 %v108, 7
    %v110 = vsub.s32 0, %v109
    %v111 = vrot.slane %v71, %v110
    %v112 = vlaneseq
    %v113 = vshrl.u32 %v112, 7
    %v114 = vsub.s32 0, %v113
    %v115 = vrot.slane %v75, %v114
    %v116 = vlaneseq
    %v117 = vshrl.u32 %v116, 7
    %v118 = vsub.s32 0, %v117
    %v119 = vrot.slane %v79, %v118
    %v120 = vlaneseq
    %v121 = vshrl.u32 %v120, 7
    %v122 = vsub.s32 0, %v121
    %v123 = vrot.slane %v83, %v122
    %v124 = vlaneseq
    %v125 = vshrl.u32 %v124, 7
    %v126 = vsub.s32 0, %v125
    %v127 = vrot.slane %v87, %v126
    %v128 = vlaneseq
    %v129 = vshrl.u32 %v128, 7
    %v130 = vsub.s32 0, %v129
    %v131 = vrot.slane %v91, %v130
    %v132 = vlaneseq
    %v133 = vshrl.u32 %v132, 7
    %v134 = vsub.s32 0, %v133
    %v135 = vrot.slane %v95, %v134
    %v136 = vmul.f32 %v58, %v107
    %v137 = vmul.f32 %v58, %v111
    %v138 = vmul.f32 %v58, %v115
    %v139 = vmul.f32 %v58, %v119
    %v140 = vmul.f32 %v58, %v123
    %v141 = vmul.f32 %v58, %v127
    %v142 = vmul.f32 %v58, %v131
    %v143 = vmul.f32 %v58, %v135
    %144 = vset.pattern.permute.xlu0 1
    %145 = vperm.xlu0 %144, %v54
    %v146 = vpop.permute.xlu0 %145
    %v148 = vlaneseq
    %v149 = vshrl.u32 %v148, 7
    %v150 = vsub.s32 1, %v149
    %v151 = vrot.slane %v50, %v150
    %v152 = vlaneseq
    %v153 = vshrl.u32 %v152, 7
    %v154 = vsub.s32 5, %v153
    %v155 = vrot.slane %v50, %v154
    %v156 = vlaneseq
    %v157 = vshrl.u32 %v156, 7
    %v158 = vsub.s32 1, %v157
    %v159 = vrot.slane %v51, %v158
    %v160 = vlaneseq
    %v161 = vshrl.u32 %v160, 7
    %v162 = vsub.s32 5, %v161
    %v163 = vrot.slane %v51, %v162
    %v164 = vlaneseq
    %v165 = vshrl.u32 %v164, 7
    %v166 = vsub.s32 1, %v165
    %v167 = vrot.slane %v52, %v166
    %v168 = vlaneseq
    %v169 = vshrl.u32 %v168, 7
    %v170 = vsub.s32 5, %v169
    %v171 = vrot.slane %v52, %v170
    %v172 = vlaneseq
    %v173 = vshrl.u32 %v172, 7
    %v174 = vsub.s32 1, %v173
    %v175 = vrot.slane %v53, %v174
    %v176 = vlaneseq
    %v177 = vshrl.u32 %v176, 7
    %v178 = vsub.s32 5, %v177
    %v179 = vrot.slane %v53, %v178
    %v188 = vlaneseq
    %v189 = vshrl.u32 %v188, 7
    %v190 = vsub.s32 1, %v189
    %v191 = vrot.slane %v151, %v190
    %v192 = vlaneseq
    %v193 = vshrl.u32 %v192, 7
    %v194 = vsub.s32 1, %v193
    %v195 = vrot.slane %v155, %v194
    %v196 = vlaneseq
    %v197 = vshrl.u32 %v196, 7
    %v198 = vsub.s32 1, %v197
    %v199 = vrot.slane %v159, %v198
    %v200 = vlaneseq
    %v201 = vshrl.u32 %v200, 7
    %v202 = vsub.s32 1, %v201
    %v203 = vrot.slane %v163, %v202
    %v204 = vlaneseq
    %v205 = vshrl.u32 %v204, 7
    %v206 = vsub.s32 1, %v205
    %v207 = vrot.slane %v167, %v206
    %v208 = vlaneseq
    %v209 = vshrl.u32 %v208, 7
    %v210 = vsub.s32 1, %v209
    %v211 = vrot.slane %v171, %v210
    %v212 = vlaneseq
    %v213 = vshrl.u32 %v212, 7
    %v214 = vsub.s32 1, %v213
    %v215 = vrot.slane %v175, %v214
    %v216 = vlaneseq
    %v217 = vshrl.u32 %v216, 7
    %v218 = vsub.s32 1, %v217
    %v219 = vrot.slane %v179, %v218
    %v220 = vmul.f32 %v146, %v191
    %v221 = vmul.f32 %v146, %v195
    %v222 = vmul.f32 %v146, %v199
    %v223 = vmul.f32 %v146, %v203
    %v224 = vmul.f32 %v146, %v207
    %v225 = vmul.f32 %v146, %v211
    %v226 = vmul.f32 %v146, %v215
    %v227 = vmul.f32 %v146, %v219
    %v228 = vadd.f32 %v136, %v220
    %v229 = vadd.f32 %v137, %v221
    %v230 = vadd.f32 %v138, %v222
    %v231 = vadd.f32 %v139, %v223
    %v232 = vadd.f32 %v140, %v224
    %v233 = vadd.f32 %v141, %v225
    %v234 = vadd.f32 %v142, %v226
    %v235 = vadd.f32 %v143, %v227
    %236 = vset.pattern.permute.xlu0 2
    %237 = vperm.xlu0 %236, %v54
    %v238 = vpop.permute.xlu0 %237
    %v240 = vlaneseq
    %v241 = vshrl.u32 %v240, 7
    %v242 = vsub.s32 2, %v241
    %v243 = vrot.slane %v50, %v242
    %v244 = vlaneseq
    %v245 = vshrl.u32 %v244, 7
    %v246 = vsub.s32 6, %v245
    %v247 = vrot.slane %v50, %v246
    %v248 = vlaneseq
    %v249 = vshrl.u32 %v248, 7
    %v250 = vsub.s32 2, %v249
    %v251 = vrot.slane %v51, %v250
    %v252 = vlaneseq
    %v253 = vshrl.u32 %v252, 7
    %v254 = vsub.s32 6, %v253
    %v255 = vrot.slane %v51, %v254
    %v256 = vlaneseq
    %v257 = vshrl.u32 %v256, 7
    %v258 = vsub.s32 2, %v257
    %v259 = vrot.slane %v52, %v258
    %v260 = vlaneseq
    %v261 = vshrl.u32 %v260, 7
    %v262 = vsub.s32 6, %v261
    %v263 = vrot.slane %v52, %v262
    %v264 = vlaneseq
    %v265 = vshrl.u32 %v264, 7
    %v266 = vsub.s32 2, %v265
    %v267 = vrot.slane %v53, %v266
    %v268 = vlaneseq
    %v269 = vshrl.u32 %v268, 7
    %v270 = vsub.s32 6, %v269
    %v271 = vrot.slane %v53, %v270
    %v280 = vlaneseq
    %v281 = vshrl.u32 %v280, 7
    %v282 = vsub.s32 2, %v281
    %v283 = vrot.slane %v243, %v282
    %v284 = vlaneseq
    %v285 = vshrl.u32 %v284, 7
    %v286 = vsub.s32 2, %v285
    %v287 = vrot.slane %v247, %v286
    %v288 = vlaneseq
    %v289 = vshrl.u32 %v288, 7
    %v290 = vsub.s32 2, %v289
    %v291 = vrot.slane %v251, %v290
    %v292 = vlaneseq
    %v293 = vshrl.u32 %v292, 7
    %v294 = vsub.s32 2, %v293
    %v295 = vrot.slane %v255, %v294
    %v296 = vlaneseq
    %v297 = vshrl.u32 %v296, 7
    %v298 = vsub.s32 2, %v297
    %v299 = vrot.slane %v259, %v298
    %v300 = vlaneseq
    %v301 = vshrl.u32 %v300, 7
    %v302 = vsub.s32 2, %v301
    %v303 = vrot.slane %v263, %v302
    %v304 = vlaneseq
    %v305 = vshrl.u32 %v304, 7
    %v306 = vsub.s32 2, %v305
    %v307 = vrot.slane %v267, %v306
    %v308 = vlaneseq
    %v309 = vshrl.u32 %v308, 7
    %v310 = vsub.s32 2, %v309
    %v311 = vrot.slane %v271, %v310
    %v312 = vmul.f32 %v238, %v283
    %v313 = vmul.f32 %v238, %v287
    %v314 = vmul.f32 %v238, %v291
    %v315 = vmul.f32 %v238, %v295
    %v316 = vmul.f32 %v238, %v299
    %v317 = vmul.f32 %v238, %v303
    %v318 = vmul.f32 %v238, %v307
    %v319 = vmul.f32 %v238, %v311
    %v320 = vadd.f32 %v228, %v312
    %v321 = vadd.f32 %v229, %v313
    %v322 = vadd.f32 %v230, %v314
    %v323 = vadd.f32 %v231, %v315
    %v324 = vadd.f32 %v232, %v316
    %v325 = vadd.f32 %v233, %v317
    %v326 = vadd.f32 %v234, %v318
    %v327 = vadd.f32 %v235, %v319
    %328 = vset.pattern.permute.xlu0 3
    %329 = vperm.xlu0 %328, %v54
    %v330 = vpop.permute.xlu0 %329
    %v332 = vlaneseq
    %v333 = vshrl.u32 %v332, 7
    %v334 = vsub.s32 3, %v333
    %v335 = vrot.slane %v50, %v334
    %v336 = vlaneseq
    %v337 = vshrl.u32 %v336, 7
    %v338 = vsub.s32 7, %v337
    %v339 = vrot.slane %v50, %v338
    %v340 = vlaneseq
    %v341 = vshrl.u32 %v340, 7
    %v342 = vsub.s32 3, %v341
    %v343 = vrot.slane %v51, %v342
    %v344 = vlaneseq
    %v345 = vshrl.u32 %v344, 7
    %v346 = vsub.s32 7, %v345
    %v347 = vrot.slane %v51, %v346
    %v348 = vlaneseq
    %v349 = vshrl.u32 %v348, 7
    %v350 = vsub.s32 3, %v349
    %v351 = vrot.slane %v52, %v350
    %v352 = vlaneseq
    %v353 = vshrl.u32 %v352, 7
    %v354 = vsub.s32 7, %v353
    %v355 = vrot.slane %v52, %v354
    %v356 = vlaneseq
    %v357 = vshrl.u32 %v356, 7
    %v358 = vsub.s32 3, %v357
    %v359 = vrot.slane %v53, %v358
    %v360 = vlaneseq
    %v361 = vshrl.u32 %v360, 7
    %v362 = vsub.s32 7, %v361
    %v363 = vrot.slane %v53, %v362
    %v372 = vlaneseq
    %v373 = vshrl.u32 %v372, 7
    %v374 = vsub.s32 3, %v373
    %v375 = vrot.slane %v335, %v374
    %v376 = vlaneseq
    %v377 = vshrl.u32 %v376, 7
    %v378 = vsub.s32 3, %v377
    %v379 = vrot.slane %v339, %v378
    %v380 = vlaneseq
    %v381 = vshrl.u32 %v380, 7
    %v382 = vsub.s32 3, %v381
    %v383 = vrot.slane %v343, %v382
    %v384 = vlaneseq
    %v385 = vshrl.u32 %v384, 7
    %v386 = vsub.s32 3, %v385
    %v387 = vrot.slane %v347, %v386
    %v388 = vlaneseq
    %v389 = vshrl.u32 %v388, 7
    %v390 = vsub.s32 3, %v389
    %v391 = vrot.slane %v351, %v390
    %v392 = vlaneseq
    %v393 = vshrl.u32 %v392, 7
    %v394 = vsub.s32 3, %v393
    %v395 = vrot.slane %v355, %v394
    %v396 = vlaneseq
    %v397 = vshrl.u32 %v396, 7
    %v398 = vsub.s32 3, %v397
    %v399 = vrot.slane %v359, %v398
    %v400 = vlaneseq
    %v401 = vshrl.u32 %v400, 7
    %v402 = vsub.s32 3, %v401
    %v403 = vrot.slane %v363, %v402
    %v404 = vmul.f32 %v330, %v375
    %v405 = vmul.f32 %v330, %v379
    %v406 = vmul.f32 %v330, %v383
    %v407 = vmul.f32 %v330, %v387
    %v408 = vmul.f32 %v330, %v391
    %v409 = vmul.f32 %v330, %v395
    %v410 = vmul.f32 %v330, %v399
    %v411 = vmul.f32 %v330, %v403
    %v412 = vadd.f32 %v320, %v404
    %v413 = vadd.f32 %v321, %v405
    %v414 = vadd.f32 %v322, %v406
    %v415 = vadd.f32 %v323, %v407
    %v416 = vadd.f32 %v324, %v408
    %v417 = vadd.f32 %v325, %v409
    %v418 = vadd.f32 %v326, %v410
    %v419 = vadd.f32 %v327, %v411
    %v420 = vld [vmem:[#allocation7] sm:$0xf]
    %422 = vset.pattern.permute.xlu0 2
    %423 = vperm.xlu0 %422, %v420
    %v424 = vpop.permute.xlu0 %423
    %v426 = vadd.f32 %v412, %v424
    %v427 = vadd.f32 %v413, %v424
    %v428 = vadd.f32 %v414, %v424
    %v429 = vadd.f32 %v415, %v424
    %v430 = vadd.f32 %v416, %v424
    %v431 = vadd.f32 %v417, %v424
    %v432 = vadd.f32 %v418, %v424
    %v433 = vadd.f32 %v419, %v424
    %vm434 = vcmask 1043456
    %v435 = vsel %vm434, %v426, 0.0
    %v436 = vsel %vm434, %v427, 0.0
    %v437 = vadd.f32 %v435, %v436
    %v438 = vsel %vm434, %v428, 0.0
    %v439 = vadd.f32 %v437, %v438
    %v440 = vsel %vm434, %v429, 0.0
    %v441 = vadd.f32 %v439, %v440
    %v442 = vsel %vm434, %v430, 0.0
    %v443 = vadd.f32 %v441, %v442
    %v444 = vsel %vm434, %v431, 0.0
    %v445 = vadd.f32 %v443, %v444
    %v446 = vsel %vm434, %v432, 0.0
    %v447 = vadd.f32 %v445, %v446
    %v448 = vsel %vm434, %v433, 0.0
    %v449 = vadd.f32 %v447, %v448
    %450 = vadd.xlane.f32.xlu0 %v449
    %v451 = vpop.xlane.xlu0 %450
    %v452 = vmul.f32 %v426, %v426
    %v453 = vmul.f32 %v427, %v427
    %v454 = vmul.f32 %v428, %v428
    %v455 = vmul.f32 %v429, %v429
    %v456 = vmul.f32 %v430, %v430
    %v457 = vmul.f32 %v431, %v431
    %v458 = vmul.f32 %v432, %v432
    %v459 = vmul.f32 %v433, %v433
    %v460 = vsel %vm434, %v452, 0.0
    %v461 = vsel %vm434, %v453, 0.0
    %v462 = vadd.f32 %v460, %v461
    %v463 = vsel %vm434, %v454, 0.0
    %v464 = vadd.f32 %v462, %v463
    %v465 = vsel %vm434, %v455, 0.0
    %v466 = vadd.f32 %v464, %v465
    %v467 = vsel %vm434, %v456, 0.0
    %v468 = vadd.f32 %v466, %v467
    %v469 = vsel %vm434, %v457, 0.0
    %v470 = vadd.f32 %v468, %v469
    %v471 = vsel %vm434, %v458, 0.0
    %v472 = vadd.f32 %v470, %v471
    %v473 = vsel %vm434, %v459, 0.0
    %v474 = vadd.f32 %v472, %v473
    %475 = vadd.xlane.f32.xlu0 %v474
    %v476 = vpop.xlane.xlu0 %475
    %v477 = vrcp.pop 1024.0
    %v478 = vmul.f32 %v451, %v477
    %v479 = vmul.f32 %v476, %v477
    %v480 = vmul.f32 %v478, %v478
    %v481 = vsub.f32 %v479, %v480
    %v482 = vmax.f32 %v481, 0.0
    %v483 = vadd.f32 %v482, 1e-05
    %v484 = vrsqrt.pop %v483
    %v485 = vmul.f32 %v420, %v484
    %487 = vset.pattern.permute.xlu0 0
    %488 = vperm.xlu0 %487, %v485
    %v489 = vpop.permute.xlu0 %488
    %v491 = vmul.f32 %v426, %v489
    %v492 = vmul.f32 %v427, %v489
    %v493 = vmul.f32 %v428, %v489
    %v494 = vmul.f32 %v429, %v489
    %v495 = vmul.f32 %v430, %v489
    %v496 = vmul.f32 %v431, %v489
    %v497 = vmul.f32 %v432, %v489
    %v498 = vmul.f32 %v433, %v489
    %v499 = vmul.f32 %v478, %v485
    %501 = vrot.lane.b32.xlu0 %v499, 1
    %v502 = vpop.permute.xlu0 %501
    %v504 = vsub.f32 %v420, %v502
    %506 = vset.pattern.permute.xlu0 1
    %507 = vperm.xlu0 %506, %v504
    %v508 = vpop.permute.xlu0 %507
    %v510 = vadd.f32 %v491, %v508
    %v511 = vadd.f32 %v492, %v508
    %v512 = vadd.f32 %v493, %v508
    %v513 = vadd.f32 %v494, %v508
    %v514 = vadd.f32 %v495, %v508
    %v515 = vadd.f32 %v496, %v508
    %v516 = vadd.f32 %v497, %v508
    %v517 = vadd.f32 %v498, %v508
    %v518 = vmax.f32 %v510, 0.0
    %v519 = vmax.f32 %v511, 0.0
    %v520 = vmax.f32 %v512, 0.0
    %v521 = vmax.f32 %v513, 0.0
    %v522 = vmax.f32 %v514, 0.0
    %v523 = vmax.f32 %v515, 0.0
    %v524 = vmax.f32 %v516, 0.0
    %v525 = vmax.f32 %v517, 0.0
    %v526 = vpack.c.bf16 %v518, %v518
    %v527 = vpack.c.bf16 %v519, %v519
    %v528 = vpack.c.bf16 %v520, %v520
    %v529 = vpack.c.bf16 %v521, %v521
    %v530 = vpack.c.bf16 %v522, %v522
    %v531 = vpack.c.bf16 %v523, %v523
    %v532 = vpack.c.bf16 %v524, %v524
    %v533 = vpack.c.bf16 %v525, %v525
    %v542 = vcombine.low %v526, %v527
    %v543 = vcombine.low %v528, %v529
    %v545 = vunpack.c.l.s4 1983009808
    %v546 = vunpack.c.0.s8 %v545
    %v547 = vlaneseq
    %v548 = vshrl.u32 %v547, 7
    %v549 = vsub.s32 %v546, %v548
    %v550 = vrot.slane %v542, %v549
    %v552 = vunpack.c.l.s4 1983009808
    %v553 = vunpack.c.0.s8 %v552
    %v554 = vlaneseq
    %v555 = vshrl.u32 %v554, 7
    %v556 = vsub.s32 %v553, %v555
    %v557 = vrot.slane %v543, %v556
    %v558 = vcombine.low %v550, %v557
    %v559 = vcombine.low %v530, %v531
    %v560 = vcombine.low %v532, %v533
    %v562 = vunpack.c.l.s4 1983009808
    %v563 = vunpack.c.0.s8 %v562
    %v564 = vlaneseq
    %v565 = vshrl.u32 %v564, 7
    %v566 = vsub.s32 %v563, %v565
    %v567 = vrot.slane %v559, %v566
    %v569 = vunpack.c.l.s4 1983009808
    %v570 = vunpack.c.0.s8 %v569
    %v571 = vlaneseq
    %v572 = vshrl.u32 %v571, 7
    %v573 = vsub.s32 %v570, %v572
    %v574 = vrot.slane %v560, %v573
    %v575 = vcombine.low %v567, %v574
    %578 = vst [vmem:[#allocation8] sm:$0xff] %v558
    %579 = vst [vmem:[#allocation8 + $0x8] sm:$0xff] %v575
    // Predicated region
    $region26: #{tpu_custom_call.1} parent=1 // pred_check
      _
    $region27: #{tpu_custom_call.1} parent=1 // pred_check_branch
      %581 = sbr.rel (0) target = $region29
    $region28: #{tpu_custom_call.1} parent=1 // pred_region
      %s583 = ssub.s32 256, 256
      %584 = vsyncadd [#allocation4], %s583
      %s586 = sshll.u32 [#allocation8], 4
      %s587 = int_to_ptr.vmem [resolvable:$true] %s586
      %589 = dma.vmem_to_hbm [thread:$0]  %s587, 256, %s3, [#allocation4]
    $region29: #{tpu_custom_call.1} parent=1 // pred_fallthru
      _
    // Predicated region
    $region30: #{tpu_custom_call.1} parent=1 // pred_check
      _
    $region31: #{tpu_custom_call.1} parent=1 // pred_check_branch
      %591 = sbr.rel (0) target = $region33
    $region32: #{tpu_custom_call.1} parent=1 // pred_region
      %592 = dma.done [#allocation4], 256
    $region33: #{tpu_custom_call.1} parent=1 // pred_fallthru
      _
    %593 = vsyncpa [#allocation3], 1
    %594 = vsyncpa [#allocation6], 1
    %595 = vsyncpa [#allocation4], 1

</llo_original>
